<compile_context>
chip_gen: v6e
topology: v6e:2x2x1
jax: 0.10.0
libtpu: 0.0.40
codegen_flags: <defaults>
</compile_context>

<pallas_src>
from functools import partial

import jax
import jax.numpy as jnp
from jax.experimental import pallas as pl
from jax.experimental.pallas import tpu as pltpu

_VMEM_LIMIT = 32 * 1024 * 1024  # leave headroom on v7x (64 MiB physical VMEM per TC)


# ----------------------------------------------------------------------------
# Fused Pallas kernels
# ----------------------------------------------------------------------------

def _make_sepconv_bn_kernel(N, H, W, pre_relu, add_res, emit_pool):
    """[pre-ReLU] + depthwise 3x3 + pointwise 1x1 + BN(batch stats) + [residual]."""

    def kernel(*refs):
        xp_ref, dw_ref, pw_ref = refs[:3]
        k = 3
        res_ref = None
        if add_res:
            res_ref = refs[k]; k += 1
        o_ref = refs[k]; k += 1
        pool_ref = None
        if emit_pool:
            pool_ref = refs[k]; k += 1
        dwcol_ref = refs[k]                       # VMEM scratch (M, Cin) f32

        taps = [dw_ref[t] for t in range(9)]      # each (1, Cin), tap-major (dy, dx)

        def load_plane(n, r):
            # relu(0) == 0, so applying the optional pre-ReLU to the zero-padded
            # rows is equivalent to zero-padding the ReLU'd activation.
            p = xp_ref[n, r]                      # (W+2, Cin) f32
            if pre_relu:
                p = jnp.maximum(p, 0.0)
            return p

        # -- phase 1: depthwise 3x3 into the column scratch (no HBM round trip).
        #    A 3-deep rolling window of ReLU'd row-planes -> each padded plane is
        #    loaded (and ReLU'd) exactly once.
        for n in range(N):
            planes = [load_plane(n, r) for r in range(3)]
            for h in range(H):
                if h > 0:
                    planes = [planes[1], planes[2], load_plane(n, h + 2)]
                slab = None
                for dy in range(3):
                    for dx in range(3):
                        t = planes[dy][dx:dx + W, :] * taps[3 * dy + dx]
                        slab = t if slab is None else slab + t
                r0 = (n * H + h) * W
                dwcol_ref[r0:r0 + W, :] = slab

        # -- phase 2: pointwise 1x1 on the MXU (bf16 operands, f32 accumulation).
        y = jnp.dot(dwcol_ref[...].astype(jnp.bfloat16), pw_ref[...],
                    preferred_element_type=jnp.float32)      # (M, Cout_block) f32

        # -- phase 3: BatchNorm, training mode (biased batch stats, gamma=1, beta=0).
        m = float(N * H * W)
        mean = jnp.sum(y, axis=0, keepdims=True) / m
        var = jnp.maximum(jnp.sum(y * y, axis=0, keepdims=True) / m - mean * mean, 0.0)
        yn = (y - mean) * jax.lax.rsqrt(var + 1e-5)
        if add_res:
            yn = yn + res_ref[...]
        o_ref[...] = yn

        # -- optional: per-sample global average pool piggybacked on the final stage.
        if emit_pool:
            hw = H * W
            for n in range(N):
                pool_ref[n:n + 1, :] = (
                    jnp.sum(yn[n * hw:(n + 1) * hw, :], axis=0, keepdims=True)
                    / float(hw))

    return kernel


def _sepconv_bn_pallas(xp, dww, pww, res, *, pre_relu, emit_pool):
    """xp: (N, H+2, W+2, Cin) f32; dww: (9, 1, Cin) f32; pww: (Cin, Cout) bf16;
       res: (M, Cout) f32 or None."""
    N, Hp, Wp, Cin = xp.shape
    H, W = Hp - 2, Wp - 2
    M = N * H * W
    Cout = pww.shape[1]
    add_res = res is not None

    # Tile wide outputs over Cout: keeps the pointwise weight block small and gives
    # v7x's second TensorCore a parallel axis. Narrow outputs stay a single tile.
    tco = 512 if (Cout > 728 and Cout % 512 == 0) else Cout
    grid = (Cout // tco,)

    in_specs = [
        pl.BlockSpec((N, Hp, Wp, Cin), lambda j: (0, 0, 0, 0)),
        pl.BlockSpec((9, 1, Cin), lambda j: (0, 0, 0)),
        pl.BlockSpec((Cin, tco), lambda j: (0, j)),
    ]
    inputs = [xp, dww, pww]
    if add_res:
        in_specs.append(pl.BlockSpec((M, tco), lambda j: (0, j)))
        inputs.append(res)

    out_shape = [jax.ShapeDtypeStruct((M, Cout), jnp.float32)]
    out_specs = [pl.BlockSpec((M, tco), lambda j: (0, j))]
    if emit_pool:
        out_shape.append(jax.ShapeDtypeStruct((N, Cout), jnp.float32))
        out_specs.append(pl.BlockSpec((N, tco), lambda j: (0, j)))

    kernel = _make_sepconv_bn_kernel(N, H, W, pre_relu, add_res, emit_pool)

    return pl.pallas_call(
        kernel,
        out_shape=tuple(out_shape) if emit_pool else out_shape[0],
        grid=grid,
        in_specs=in_specs,
        out_specs=tuple(out_specs) if emit_pool else out_specs[0],
        scratch_shapes=[pltpu.VMEM((M, Cin), jnp.float32)],
        compiler_params=pltpu.CompilerParams(
            dimension_semantics=("parallel",),
            vmem_limit_bytes=_VMEM_LIMIT),
    )(*inputs)


def _make_matmul_bn_kernel(relu, add_res):
    """Dense matmul + BN(batch stats) + [ReLU] + [residual add]."""

    def kernel(*refs):
        a_ref, w_ref = refs[:2]
        k = 2
        res_ref = None
        if add_res:
            res_ref = refs[k]; k += 1
        o_ref = refs[k]

        y = jnp.dot(a_ref[...], w_ref[...], preferred_element_type=jnp.float32)
        m = float(a_ref.shape[0])
        mean = jnp.sum(y, axis=0, keepdims=True) / m
        var = jnp.maximum(jnp.sum(y * y, axis=0, keepdims=True) / m - mean * mean, 0.0)
        yn = (y - mean) * jax.lax.rsqrt(var + 1e-5)
        if relu:
            yn = jnp.maximum(yn, 0.0)
        if add_res:
            yn = yn + res_ref[...]
        o_ref[...] = yn

    return kernel


def _matmul_bn_pallas(a, w, res, *, relu):
    """Fused (M,K)@(K,Cout) bf16 matmul + BatchNorm + [ReLU] + [residual]; one block."""
    M = a.shape[0]
    Cout = w.shape[1]
    add_res = res is not None
    args = (a, w) + ((res,) if add_res else ())
    return pl.pallas_call(
        _make_matmul_bn_kernel(relu, add_res),
        out_shape=jax.ShapeDtypeStruct((M, Cout), jnp.float32),
        compiler_params=pltpu.CompilerParams(vmem_limit_bytes=_VMEM_LIMIT),
    )(*args)


# ----------------------------------------------------------------------------
# Stage wrappers (glue: padding / im2col / maxpool / reshapes; compute in Pallas)
# ----------------------------------------------------------------------------

@partial(jax.jit, static_argnames=("pre_relu", "emit_pool"))
def sepconv_bn_stage(x, dww, pww, res, *, pre_relu, emit_pool=False):
    """SeparableConv2d(3x3, pad 1) + BatchNorm, with optional preceding ReLU and
    optional fused residual add.  x: (N,H,W,Cin) f32 -> (N,H,W,Cout) f32."""
    N, H, W, _ = x.shape
    Cout = pww.shape[1]
    xp = jnp.pad(x, ((0, 0), (1, 1), (1, 1), (0, 0)))
    res2 = None if res is None else res.reshape(N * H * W, Cout)
    out = _sepconv_bn_pallas(xp, dww, pww, res2, pre_relu=pre_relu,
                             emit_pool=emit_pool)
    if emit_pool:
        y, pool = out
        return y.reshape(N, H, W, Cout), pool
    return out.reshape(N, H, W, Cout)


@partial(jax.jit, static_argnames=("kh", "kw", "stride", "relu"))
def dense_conv_bn_stage(x, w, *, kh, kw, stride, relu):
    """Dense conv (pad 0, no bias) + BatchNorm (+ReLU) via im2col + fused Pallas kernel.
    # TODO(synk): conv1+bn1+relu+conv2+bn2 could be fused into a single kernel and the
    # C=32/64 stores made lane-dense; kept as two fused stages for robustness."""
    N, H, W, C = x.shape
    Ho = (H - kh) // stride + 1
    Wo = (W - kw) // stride + 1
    cols = [x[:, dy:dy + stride * Ho:stride, dx:dx + stride * Wo:stride, :]
            for dy in range(kh) for dx in range(kw)]
    patches = jnp.concatenate(cols, axis=-1).reshape(N * Ho * Wo, kh * kw * C)
    y = _matmul_bn_pallas(patches.astype(jnp.bfloat16), w, None, relu=relu)
    return y.reshape(N, Ho, Wo, w.shape[1])


def _maxpool3x3s2(x):
    # TODO(synk): MaxPool2d(3, stride=2, padding=1) kept as XLA reduce_window glue
    # (cheap vs. the fused conv/BN Pallas hot path).
    return jax.lax.reduce_window(
        x, -jnp.inf, jax.lax.max,
        window_dimensions=(1, 3, 3, 1),
        window_strides=(1, 2, 2, 1),
        padding=((0, 0), (1, 1), (1, 1), (0, 0)))


@partial(jax.jit, static_argnames=("stride",))
def skip_bn_add_stage(x_in, main, w, *, stride):
    """Block skip path: 1x1 stride-s conv + BatchNorm, fused with the residual add
    of the (maxpooled) main path."""
    if stride != 1:
        main = _maxpool3x3s2(main)
    N, Ho, Wo, Cout = main.shape
    a = x_in[:, ::stride, ::stride, :]
    Cin = a.shape[-1]
    a2 = a.reshape(N * Ho * Wo, Cin).astype(jnp.bfloat16)
    res2 = main.reshape(N * Ho * Wo, Cout)
    y = _matmul_bn_pallas(a2, w, res2, relu=False)
    return y.reshape(N, Ho, Wo, Cout)


# ----------------------------------------------------------------------------
# Xception backbone structure (children()[:-2]) and synthetic parameters
# ----------------------------------------------------------------------------

# (in_f, out_f, reps, strides, start_with_relu, grow_first)
BLOCK_CFGS = [
    (64, 128, 2, 2, False, True),
    (128, 256, 2, 2, True, True),
    (256, 728, 2, 2, True, True),
    (728, 728, 3, 1, True, True),
    (728, 728, 3, 1, True, True),
    (728, 728, 3, 1, True, True),
    (728, 728, 3, 1, True, True),
    (728, 728, 3, 1, True, True),
    (728, 728, 3, 1, True, True),
    (728, 728, 3, 1, True, True),
    (728, 728, 3, 1, True, True),
    (728, 1024, 2, 2, True, False),
]


class KeyGen:
    def __init__(self, seed):
        self.key = jax.random.PRNGKey(seed)

    def __call__(self):
        self.key, sub = jax.random.split(self.key)
        return sub


def _dense_conv_init(key, kh, kw, cin, cout):
    fan_in = kh * kw * cin
    w = jax.random.normal(key, (kh, kw, cin, cout), jnp.float32) * (2.0 / fan_in) ** 0.5
    return w.reshape(kh * kw * cin, cout).astype(jnp.bfloat16)   # bf16 MXU operand


def _pw_init(key, cin, cout):
    w = jax.random.normal(key, (cin, cout), jnp.float32) * (2.0 / cin) ** 0.5
    return w.astype(jnp.bfloat16)                                # bf16 MXU operand


def _dw_init(key, c):
    w = jax.random.normal(key, (3, 3, c), jnp.float32) * (2.0 / 9.0) ** 0.5
    return w.reshape(9, 1, c)                                    # tap-major (dy, dx), f32 (VPU)


def _build_block_params(kg, cfg):
    in_f, out_f, reps, strides, _start_with_relu, grow_first = cfg
    p = {"seps": []}
    filters = in_f
    if grow_first:
        p["seps"].append({"dw": _dw_init(kg(), in_f), "pw": _pw_init(kg(), in_f, out_f)})
        filters = out_f
    for _ in range(reps - 1):
        p["seps"].append({"dw": _dw_init(kg(), filters), "pw": _pw_init(kg(), filters, filters)})
    if not grow_first:
        p["seps"].append({"dw": _dw_init(kg(), in_f), "pw": _pw_init(kg(), in_f, out_f)})
    if out_f != in_f or strides != 1:
        p["skip"] = _pw_init(kg(), in_f, out_f)
    else:
        p["skip"] = None
    return p


def init_params(seed=42):
    # Deterministic synthetic weights (no pretrained checkpoint loading).
    kg = KeyGen(seed)
    return {
        "conv1": _dense_conv_init(kg(), 3, 3, 3, 32),
        "conv2": _dense_conv_init(kg(), 3, 3, 32, 64),
        "blocks": [_build_block_params(kg, cfg) for cfg in BLOCK_CFGS],
        "conv3": {"dw": _dw_init(kg(), 1024), "pw": _pw_init(kg(), 1024, 1536)},
        "conv4": {"dw": _dw_init(kg(), 1536), "pw": _pw_init(kg(), 1536, 2048)},
    }


# ----------------------------------------------------------------------------
# Forward pass
# ----------------------------------------------------------------------------

def block_forward(x, p, cfg):
    in_f, out_f, reps, strides, start_with_relu, grow_first = cfg
    inp = x
    n_seps = len(p["seps"])
    h = x
    for i, sp in enumerate(p["seps"]):
        pre_relu = start_with_relu or i > 0
        # identity-skip residual add is fused into the block's last sepconv+BN kernel
        fuse_add = (p["skip"] is None) and (i == n_seps - 1)
        res = inp if fuse_add else None
        h = sepconv_bn_stage(h, sp["dw"], sp["pw"], res, pre_relu=pre_relu)
    if p["skip"] is not None:
        # skip conv + skipbn + residual add (and the main-path maxpool) in one stage
        return skip_bn_add_stage(inp, h, p["skip"], stride=strides)
    return h


def backbone(images_nchw, params):
    x = jnp.transpose(images_nchw, (0, 2, 3, 1)).astype(jnp.float32)  # NCHW -> NHWC
    x = dense_conv_bn_stage(x, params["conv1"], kh=3, kw=3, stride=2, relu=True)   # conv1+bn1+relu
    x = dense_conv_bn_stage(x, params["conv2"], kh=3, kw=3, stride=1, relu=False)  # conv2+bn2
    for cfg, bp in zip(BLOCK_CFGS, params["blocks"]):
        x = block_forward(x, bp, cfg)
    x = sepconv_bn_stage(x, params["conv3"]["dw"], params["conv3"]["pw"], None,
                         pre_relu=False)                                           # conv3+bn3
    x, pool = sepconv_bn_stage(x, params["conv4"]["dw"], params["conv4"]["pw"], None,
                               pre_relu=False, emit_pool=True)                     # conv4+bn4 (+pool)
    return x, pool


def api_net_gradcam_forward(images, params):
    """images: (N, 3, H, W) NCHW float32; returns conv_out in NCHW like PyTorch."""
    feat, pool = backbone(images, params)                 # feat: (N,h,w,2048) NHWC
    conv_out = jnp.transpose(feat, (0, 3, 1, 2))          # NCHW
    print(f"conv_out {conv_out.shape}")

    # TODO(synk): self.avg = AvgPool2d(kernel_size=14, stride=1) is invalid at this
    # small spatial size; computed as a global average pool fused into the conv4+bn4
    # Pallas kernel and, as in the PyTorch forward, only printed then discarded.
    pool_out_old = pool.reshape(pool.shape[0], pool.shape[1], 1, 1)
    print(f"pool_out_old {pool_out_old.shape}")
    pool_out = jnp.squeeze(pool_out_old)
    print(f"pool_out {pool_out.shape}")

    return conv_out


if __name__ == "__main__":
    key = jax.random.PRNGKey(0)
    images = jax.random.normal(key, (2, 3, 32, 32), jnp.float32)  # NCHW, small spatial
    params = init_params(seed=42)

    conv_out = api_net_gradcam_forward(images, params)
    conv_out = jax.block_until_ready(conv_out)

    assert conv_out.shape == (2, 2048, 1, 1), conv_out.shape
    assert bool(jnp.all(jnp.isfinite(conv_out)))
    print("KERNEL_OK")
</pallas_src>

<mosaic_0001>
module attributes {stable_mosaic.version = 11 : i64} {
  func.func @kernel(%arg0: memref<450x27xbf16, #tpu.memory_space<vmem>>, %arg1: memref<27x32xbf16, #tpu.memory_space<vmem>>, %arg2: memref<450x32xf32, #tpu.memory_space<vmem>>) attributes {dimension_semantics = [], scalar_prefetch = 0 : i64, scratch_operands = 0 : i64, tpu.core_type = #tpu.core_type<tc>} {
    %c0 = arith.constant 0 : index
    %c0_0 = arith.constant 0 : index
    %0 = vector.load %arg0[%c0, %c0_0] : memref<450x27xbf16, #tpu.memory_space<vmem>>, vector<450x27xbf16>
    %c0_1 = arith.constant 0 : index
    %c0_2 = arith.constant 0 : index
    %1 = vector.load %arg1[%c0_1, %c0_2] : memref<27x32xbf16, #tpu.memory_space<vmem>>, vector<27x32xbf16>
    %cst = arith.constant dense<0.000000e+00> : vector<450x32xf32>
    %2 = tpu.matmul %0, %1, %cst {dimension_numbers = #tpu.dot_dimension_numbers<[1], [0], [0], [1], [0, 0, 1, 1], [], []>} : vector<450x27xbf16>, vector<27x32xbf16>, vector<450x32xf32> -> vector<450x32xf32>
    %cst_3 = arith.constant dense<0.000000e+00> : vector<32xf32>
    %3 = vector.multi_reduction <add>, %2, %cst_3 [0] : vector<450x32xf32> to vector<32xf32>
    %4 = vector.shape_cast %3 : vector<32xf32> to vector<1x32xf32>
    %cst_4 = arith.constant 4.500000e+02 : f32
    %5 = vector.broadcast %cst_4 : f32 to vector<1x32xf32>
    %6 = arith.divf %4, %5 : vector<1x32xf32>
    %7 = arith.mulf %2, %2 : vector<450x32xf32>
    %cst_5 = arith.constant dense<0.000000e+00> : vector<32xf32>
    %8 = vector.multi_reduction <add>, %7, %cst_5 [0] : vector<450x32xf32> to vector<32xf32>
    %9 = vector.shape_cast %8 : vector<32xf32> to vector<1x32xf32>
    %cst_6 = arith.constant 4.500000e+02 : f32
    %10 = vector.broadcast %cst_6 : f32 to vector<1x32xf32>
    %11 = arith.divf %9, %10 : vector<1x32xf32>
    %12 = arith.mulf %6, %6 : vector<1x32xf32>
    %13 = arith.subf %11, %12 : vector<1x32xf32>
    %cst_7 = arith.constant 0.000000e+00 : f32
    %14 = vector.broadcast %cst_7 : f32 to vector<1x32xf32>
    %15 = arith.maximumf %13, %14 : vector<1x32xf32>
    %16 = vector.broadcast %6 : vector<1x32xf32> to vector<450x32xf32>
    %17 = arith.subf %2, %16 : vector<450x32xf32>
    %cst_8 = arith.constant 9.99999974E-6 : f32
    %18 = vector.broadcast %cst_8 : f32 to vector<1x32xf32>
    %19 = arith.addf %15, %18 : vector<1x32xf32>
    %20 = math.rsqrt %19 : vector<1x32xf32>
    %21 = vector.broadcast %20 : vector<1x32xf32> to vector<450x32xf32>
    %22 = arith.mulf %17, %21 : vector<450x32xf32>
    %cst_9 = arith.constant 0.000000e+00 : f32
    %23 = vector.broadcast %cst_9 : f32 to vector<450x32xf32>
    %24 = arith.maximumf %22, %23 : vector<450x32xf32>
    %c0_10 = arith.constant 0 : index
    %c0_11 = arith.constant 0 : index
    %25 = vector.load %arg2[%c0_10, %c0_11] : memref<450x32xf32, #tpu.memory_space<vmem>>, vector<450x32xf32>
    tpu.vector_store %arg2[%c0_10, %c0_11], %24 {strides = array<i32>} : memref<450x32xf32, #tpu.memory_space<vmem>>, vector<450x32xf32>,
    return
  }
}

</mosaic_0001>

<llo_original>
// kernel: dense_conv_bn_stage.1
$region0: #{dense_conv_bn_stage.1}
  #allocation0 [shape = 'u32[]', space=smem, size = 0x4, offset = 0x4, fixed_abs, tag = 'smem constant byte address 0x4 - core index']
  #allocation1 [shape = 'u32[144,128]{1,0:T(1,128)}', space=vmem, size = 0x12000, scoped, tag = 'internal scratch']
  %s0 = inlined_call_operand.vmem [shape: bf16[450,27], index: 0, kind: input, shape index: {}]
  %s1 = inlined_call_operand.vmem [shape: bf16[27,32], index: 1, kind: input, shape index: {}]
  %s2 = inlined_call_operand.vmem [shape: f32[450,32], index: 2, kind: output, shape index: {}]
  %s3 = sld [smem:[#allocation0]]
  $region18: #{dense_conv_bn_stage.1} parent=0
    _
  %s5 = ssub.s32 1, %s3
  %s6 = scalar_select 0, %s5, %s3
  // Predicated region
  $region2: #{dense_conv_bn_stage.1} parent=0 // pred_check
    _
  $region3: #{dense_conv_bn_stage.1} parent=0 // pred_check_branch
    %8 = sbr.rel (0) target = $region5
  $region4: #{dense_conv_bn_stage.1} parent=0 // pred_region
    _
  $region5: #{dense_conv_bn_stage.1} parent=0 // pred_fallthru
    _
  // Predicated region
  $region6: #{dense_conv_bn_stage.1} parent=0 // pred_check
    _
  $region7: #{dense_conv_bn_stage.1} parent=0 // pred_check_branch
    %10 = sbr.rel (0) target = $region9
  $region8: #{dense_conv_bn_stage.1} parent=0 // pred_region
    _
  $region9: #{dense_conv_bn_stage.1} parent=0 // pred_fallthru
    _
  %v12 = vld [vmem:[%s0] sm:$0xf]
  %v13 = vld [vmem:[%s0 + $0x4] sm:$0xf]
  %v14 = vld [vmem:[%s0 + $0x8] sm:$0xf]
  %v15 = vld [vmem:[%s0 + $0xc] sm:$0xf]
  %v16 = vld [vmem:[%s0 + $0x10] sm:$0xf]
  %v17 = vld [vmem:[%s0 + $0x14] sm:$0xf]
  %v18 = vld [vmem:[%s0 + $0x18] sm:$0xf]
  %v19 = vld [vmem:[%s0 + $0x1c] sm:$0xf]
  %v20 = vld [vmem:[%s0 + $0x20] sm:$0xf]
  %v21 = vld [vmem:[%s0 + $0x24] sm:$0xf]
  %v22 = vld [vmem:[%s0 + $0x28] sm:$0xf]
  %v23 = vld [vmem:[%s0 + $0x2c] sm:$0xf]
  %v24 = vld [vmem:[%s0 + $0x30] sm:$0xf]
  %v25 = vld [vmem:[%s0 + $0x34] sm:$0xf]
  %v26 = vld [vmem:[%s0 + $0x38] sm:$0xf]
  %v27 = vld [vmem:[%s0 + $0x3c] sm:$0xf]
  %v28 = vld [vmem:[%s0 + $0x40] sm:$0xf]
  %v29 = vld [vmem:[%s0 + $0x44] sm:$0xf]
  %v30 = vld [vmem:[%s0 + $0x48] sm:$0xf]
  %v31 = vld [vmem:[%s0 + $0x4c] sm:$0xf]
  %v32 = vld [vmem:[%s0 + $0x50] sm:$0xf]
  %v33 = vld [vmem:[%s0 + $0x54] sm:$0xf]
  %v34 = vld [vmem:[%s0 + $0x58] sm:$0xf]
  %v35 = vld [vmem:[%s0 + $0x5c] sm:$0xf]
  %v36 = vld [vmem:[%s0 + $0x60] sm:$0xf]
  %v37 = vld [vmem:[%s0 + $0x64] sm:$0xf]
  %v38 = vld [vmem:[%s0 + $0x68] sm:$0xf]
  %v39 = vld [vmem:[%s0 + $0x6c] sm:$0xf]
  %v40 = vld [vmem:[%s0 + $0x70] sm:$0xf]
  %v41 = vld [vmem:[%s0 + $0x74] sm:$0xf]
  %v42 = vld [vmem:[%s0 + $0x78] sm:$0xf]
  %v43 = vld [vmem:[%s0 + $0x7c] sm:$0xf]
  %v44 = vld [vmem:[%s0 + $0x80] sm:$0xf]
  %v45 = vld [vmem:[%s0 + $0x84] sm:$0xf]
  %v46 = vld [vmem:[%s0 + $0x88] sm:$0xf]
  %v47 = vld [vmem:[%s0 + $0x8c] sm:$0xf]
  %v48 = vld [vmem:[%s0 + $0x90] sm:$0xf]
  %v49 = vld [vmem:[%s0 + $0x94] sm:$0xf]
  %v50 = vld [vmem:[%s0 + $0x98] sm:$0xf]
  %v51 = vld [vmem:[%s0 + $0x9c] sm:$0xf]
  %v52 = vld [vmem:[%s0 + $0xa0] sm:$0xf]
  %v53 = vld [vmem:[%s0 + $0xa4] sm:$0xf]
  %v54 = vld [vmem:[%s0 + $0xa8] sm:$0xf]
  %v55 = vld [vmem:[%s0 + $0xac] sm:$0xf]
  %v56 = vld [vmem:[%s0 + $0xb0] sm:$0xf]
  %v57 = vld [vmem:[%s0 + $0xb4] sm:$0xf]
  %v58 = vld [vmem:[%s0 + $0xb8] sm:$0xf]
  %v59 = vld [vmem:[%s0 + $0xbc] sm:$0xf]
  %v60 = vld [vmem:[%s0 + $0xc0] sm:$0xf]
  %v61 = vld [vmem:[%s0 + $0xc4] sm:$0xf]
  %v62 = vld [vmem:[%s0 + $0xc8] sm:$0xf]
  %v63 = vld [vmem:[%s0 + $0xcc] sm:$0xf]
  %v64 = vld [vmem:[%s0 + $0xd0] sm:$0xf]
  %v65 = vld [vmem:[%s0 + $0xd4] sm:$0xf]
  %v66 = vld [vmem:[%s0 + $0xd8] sm:$0xf]
  %v67 = vld [vmem:[%s0 + $0xdc] sm:$0xf]
  %v68 = vld [vmem:[%s0 + $0xe0] sm:$0x1]
  %v69 = vld [vmem:[%s1] sm:$0xf]
  %v70 = vld [vmem:[%s1 + $0x4] sm:$0xf]
  %v71 = vld [vmem:[%s1 + $0x8] sm:$0xf]
  %v72 = vld [vmem:[%s1 + $0xc] sm:$0x3]
  %v130 = vunpack.c.l.b16 %v12
  %v131 = vunpack.c.l.b16 %v13
  %v132 = vunpack.c.l.b16 %v14
  %v133 = vunpack.c.l.b16 %v15
  %v134 = vunpack.c.l.b16 %v16
  %v135 = vunpack.c.l.b16 %v17
  %v136 = vunpack.c.l.b16 %v18
  %v137 = vunpack.c.l.b16 %v19
  %v138 = vunpack.c.l.b16 %v20
  %v139 = vunpack.c.l.b16 %v21
  %v140 = vunpack.c.l.b16 %v22
  %v141 = vunpack.c.l.b16 %v23
  %v142 = vunpack.c.l.b16 %v24
  %v143 = vunpack.c.l.b16 %v25
  %v144 = vunpack.c.l.b16 %v26
  %v145 = vunpack.c.l.b16 %v27
  %v146 = vunpack.c.l.b16 %v28
  %v147 = vunpack.c.l.b16 %v29
  %v148 = vunpack.c.l.b16 %v30
  %v149 = vunpack.c.l.b16 %v31
  %v150 = vunpack.c.l.b16 %v32
  %v151 = vunpack.c.l.b16 %v33
  %v152 = vunpack.c.l.b16 %v34
  %v153 = vunpack.c.l.b16 %v35
  %v154 = vunpack.c.l.b16 %v36
  %v155 = vunpack.c.l.b16 %v37
  %v156 = vunpack.c.l.b16 %v38
  %v157 = vunpack.c.l.b16 %v39
  %v158 = vunpack.c.l.b16 %v40
  %v159 = vunpack.c.l.b16 %v41
  %v160 = vunpack.c.l.b16 %v42
  %v161 = vunpack.c.l.b16 %v43
  %v162 = vunpack.c.l.b16 %v44
  %v163 = vunpack.c.l.b16 %v45
  %v164 = vunpack.c.l.b16 %v46
  %v165 = vunpack.c.l.b16 %v47
  %v166 = vunpack.c.l.b16 %v48
  %v167 = vunpack.c.l.b16 %v49
  %v168 = vunpack.c.l.b16 %v50
  %v169 = vunpack.c.l.b16 %v51
  %v170 = vunpack.c.l.b16 %v52
  %v171 = vunpack.c.l.b16 %v53
  %v172 = vunpack.c.l.b16 %v54
  %v173 = vunpack.c.l.b16 %v55
  %v174 = vunpack.c.l.b16 %v56
  %v175 = vunpack.c.l.b16 %v57
  %v176 = vunpack.c.l.b16 %v58
  %v177 = vunpack.c.l.b16 %v59
  %v178 = vunpack.c.l.b16 %v60
  %v179 = vunpack.c.l.b16 %v61
  %v180 = vunpack.c.l.b16 %v62
  %v181 = vunpack.c.l.b16 %v63
  %v182 = vunpack.c.l.b16 %v64
  %v183 = vunpack.c.l.b16 %v65
  %v184 = vunpack.c.l.b16 %v66
  %v185 = vunpack.c.l.b16 %v67
  %v186 = vunpack.c.l.b16 %v68
  %v187 = vpack.c.b16 %v131, %v130
  %v188 = vpack.c.b16 %v133, %v132
  %v189 = vpack.c.b16 %v135, %v134
  %v190 = vpack.c.b16 %v137, %v136
  %v191 = vpack.c.b16 %v139, %v138
  %v192 = vpack.c.b16 %v141, %v140
  %v193 = vpack.c.b16 %v143, %v142
  %v194 = vpack.c.b16 %v145, %v144
  %v195 = vpack.c.b16 %v147, %v146
  %v196 = vpack.c.b16 %v149, %v148
  %v197 = vpack.c.b16 %v151, %v150
  %v198 = vpack.c.b16 %v153, %v152
  %v199 = vpack.c.b16 %v155, %v154
  %v200 = vpack.c.b16 %v157, %v156
  %v201 = vpack.c.b16 %v159, %v158
  %v202 = vpack.c.b16 %v161, %v160
  %v203 = vpack.c.b16 %v163, %v162
  %v204 = vpack.c.b16 %v165, %v164
  %v205 = vpack.c.b16 %v167, %v166
  %v206 = vpack.c.b16 %v169, %v168
  %v207 = vpack.c.b16 %v171, %v170
  %v208 = vpack.c.b16 %v173, %v172
  %v209 = vpack.c.b16 %v175, %v174
  %v210 = vpack.c.b16 %v177, %v176
  %v211 = vpack.c.b16 %v179, %v178
  %v212 = vpack.c.b16 %v181, %v180
  %v213 = vpack.c.b16 %v183, %v182
  %v214 = vpack.c.b16 %v185, %v184
  %v215 = vpack.c.b16 %v186, %v186
  %v220 = vunpack.c.l.b16 %v69
  %v221 = vunpack.c.l.b16 %v70
  %v222 = vunpack.c.l.b16 %v71
  %v223 = vunpack.c.l.b16 %v72
  %v224 = vpack.c.b16 %v221, %v220
  %v225 = vpack.c.b16 %v223, %v222
  %vm227 = vcmask 220160
  %v229 = vsel %vm227, %v187, 0
  %v232 = vsel %vm227, %v188, 0
  %v235 = vsel %vm227, %v189, 0
  %v238 = vsel %vm227, %v190, 0
  %v241 = vsel %vm227, %v191, 0
  %v244 = vsel %vm227, %v192, 0
  %v247 = vsel %vm227, %v193, 0
  %v250 = vsel %vm227, %v194, 0
  %v253 = vsel %vm227, %v195, 0
  %v256 = vsel %vm227, %v196, 0
  %v259 = vsel %vm227, %v197, 0
  %v262 = vsel %vm227, %v198, 0
  %v265 = vsel %vm227, %v199, 0
  %v268 = vsel %vm227, %v200, 0
  %v271 = vsel %vm227, %v201, 0
  %v274 = vsel %vm227, %v202, 0
  %v277 = vsel %vm227, %v203, 0
  %v280 = vsel %vm227, %v204, 0
  %v283 = vsel %vm227, %v205, 0
  %v286 = vsel %vm227, %v206, 0
  %v289 = vsel %vm227, %v207, 0
  %v292 = vsel %vm227, %v208, 0
  %v295 = vsel %vm227, %v209, 0
  %v298 = vsel %vm227, %v210, 0
  %v301 = vsel %vm227, %v211, 0
  %v304 = vsel %vm227, %v212, 0
  %v307 = vsel %vm227, %v213, 0
  %v310 = vsel %vm227, %v214, 0
  %v313 = vsel %vm227, %v215, 0
  %vm315 = vcmask 1044480
  %vm316 = vcmask 1045504
  %v317 = vsel %vm315, 4294967295, 65535
  %v318 = vsel %vm316, %v317, 0
  %v320 = vand.u32 %v225, %v318
  %322 = vmatprep.subr.bf16.mxu0 0
  %323 = vmatpush1.bf16.msra.mxu0 0
  %324 = vmatprep.subr.bf16.mxu0 0
  %325 = vmatpush1.bf16.msra.mxu0 0
  %326 = vmatprep.subr.bf16.mxu0 0
  %327 = vmatpush1.bf16.msra.mxu0 0
  %328 = vmatprep.subr.bf16.mxu0 0
  %329 = vmatpush1.bf16.msra.mxu0 0
  %330 = vmatprep.subr.bf16.mxu0 0
  %331 = vmatpush1.bf16.msra.mxu0 0
  %332 = vmatprep.subr.bf16.mxu0 0
  %333 = vmatpush1.bf16.msra.mxu0 0
  %334 = vmatprep.subr.bf16.mxu0 0
  %335 = vmatpush1.bf16.msra.mxu0 %v320
  %336 = vmatprep.subr.bf16.mxu0 0
  %337 = vmatpush1.bf16.msra.mxu0 %v224
  %338 = vmatprep.subr.bf16.mxu0 0
  %339 = vmatpush2.bf16.msra.mxu0 0
  %340 = vmatprep.subr.bf16.mxu0 0
  %341 = vmatpush2.bf16.msra.mxu0 0
  %342 = vmatprep.subr.bf16.mxu0 0
  %343 = vmatpush2.bf16.msra.mxu0 0
  %344 = vmatprep.subr.bf16.mxu0 0
  %345 = vmatpush2.bf16.msra.mxu0 0
  %346 = vmatprep.subr.bf16.mxu0 0
  %347 = vmatpush2.bf16.msra.mxu0 0
  %348 = vmatprep.subr.bf16.mxu0 0
  %349 = vmatpush2.bf16.msra.mxu0 0
  %350 = vmatprep.subr.bf16.mxu0 0
  %351 = vmatpush2.bf16.msra.mxu0 0
  %352 = vmatprep.subr.bf16.mxu0 0
  %353 = vmatpush2.bf16.msra.mxu0 0
  %354 = vmatprep.mubr.bf16.mxu0 0
  %355 = vmatmul.mubr.bf16.gmra.mxu0 %v229
  %v356 = vpop.f32.mrf.mxu0
  %v357 = vadd.f32 0.0, %v356
  %v358 = vpop.f32.mrf.mxu0
  %v359 = vpop.f32.mrf.mxu0
  %v360 = vadd.f32 0.0, %v359
  %v361 = vpop.f32.mrf.mxu0
  %362 = vmatprep.mubr.bf16.mxu0 0
  %363 = vmatmul.mubr.bf16.gmra.mxu0 %v232
  %v364 = vpop.f32.mrf.mxu0
  %v365 = vadd.f32 0.0, %v364
  %v366 = vpop.f32.mrf.mxu0
  %v367 = vpop.f32.mrf.mxu0
  %v368 = vadd.f32 0.0, %v367
  %v369 = vpop.f32.mrf.mxu0
  %370 = vmatprep.mubr.bf16.mxu0 0
  %371 = vmatmul.mubr.bf16.gmra.mxu0 %v235
  %v372 = vpop.f32.mrf.mxu0
  %v373 = vadd.f32 0.0, %v372
  %v374 = vpop.f32.mrf.mxu0
  %v375 = vpop.f32.mrf.mxu0
  %v376 = vadd.f32 0.0, %v375
  %v377 = vpop.f32.mrf.mxu0
  %378 = vmatprep.mubr.bf16.mxu0 0
  %379 = vmatmul.mubr.bf16.gmra.mxu0 %v238
  %v380 = vpop.f32.mrf.mxu0
  %v381 = vadd.f32 0.0, %v380
  %v382 = vpop.f32.mrf.mxu0
  %v383 = vpop.f32.mrf.mxu0
  %v384 = vadd.f32 0.0, %v383
  %v385 = vpop.f32.mrf.mxu0
  %386 = vmatprep.mubr.bf16.mxu0 0
  %387 = vmatmul.mubr.bf16.gmra.mxu0 %v241
  %v388 = vpop.f32.mrf.mxu0
  %v389 = vadd.f32 0.0, %v388
  %v390 = vpop.f32.mrf.mxu0
  %v391 = vpop.f32.mrf.mxu0
  %v392 = vadd.f32 0.0, %v391
  %v393 = vpop.f32.mrf.mxu0
  %394 = vmatprep.mubr.bf16.mxu0 0
  %395 = vmatmul.mubr.bf16.gmra.mxu0 %v244
  %v396 = vpop.f32.mrf.mxu0
  %v397 = vadd.f32 0.0, %v396
  %v398 = vpop.f32.mrf.mxu0
  %v399 = vpop.f32.mrf.mxu0
  %v400 = vadd.f32 0.0, %v399
  %v401 = vpop.f32.mrf.mxu0
  %402 = vmatprep.mubr.bf16.mxu0 0
  %403 = vmatmul.mubr.bf16.gmra.mxu0 %v247
  %v404 = vpop.f32.mrf.mxu0
  %v405 = vadd.f32 0.0, %v404
  %v406 = vpop.f32.mrf.mxu0
  %v407 = vpop.f32.mrf.mxu0
  %v408 = vadd.f32 0.0, %v407
  %v409 = vpop.f32.mrf.mxu0
  %410 = vmatprep.mubr.bf16.mxu0 0
  %411 = vmatmul.mubr.bf16.gmra.mxu0 %v250
  %v412 = vpop.f32.mrf.mxu0
  %v413 = vadd.f32 0.0, %v412
  %v414 = vpop.f32.mrf.mxu0
  %v415 = vpop.f32.mrf.mxu0
  %v416 = vadd.f32 0.0, %v415
  %v417 = vpop.f32.mrf.mxu0
  %418 = vmatprep.mubr.bf16.mxu0 0
  %419 = vmatmul.mubr.bf16.gmra.mxu0 %v253
  %v420 = vpop.f32.mrf.mxu0
  %v421 = vadd.f32 0.0, %v420
  %v422 = vpop.f32.mrf.mxu0
  %v423 = vpop.f32.mrf.mxu0
  %v424 = vadd.f32 0.0, %v423
  %v425 = vpop.f32.mrf.mxu0
  %426 = vmatprep.mubr.bf16.mxu0 0
  %427 = vmatmul.mubr.bf16.gmra.mxu0 %v256
  %v428 = vpop.f32.mrf.mxu0
  %v429 = vadd.f32 0.0, %v428
  %v430 = vpop.f32.mrf.mxu0
  %v431 = vpop.f32.mrf.mxu0
  %v432 = vadd.f32 0.0, %v431
  %v433 = vpop.f32.mrf.mxu0
  %434 = vmatprep.mubr.bf16.mxu0 0
  %435 = vmatmul.mubr.bf16.gmra.mxu0 %v259
  %v436 = vpop.f32.mrf.mxu0
  %v437 = vadd.f32 0.0, %v436
  %v438 = vpop.f32.mrf.mxu0
  %v439 = vpop.f32.mrf.mxu0
  %v440 = vadd.f32 0.0, %v439
  %v441 = vpop.f32.mrf.mxu0
  %442 = vmatprep.mubr.bf16.mxu0 0
  %443 = vmatmul.mubr.bf16.gmra.mxu0 %v262
  %v444 = vpop.f32.mrf.mxu0
  %v445 = vadd.f32 0.0, %v444
  %v446 = vpop.f32.mrf.mxu0
  %v447 = vpop.f32.mrf.mxu0
  %v448 = vadd.f32 0.0, %v447
  %v449 = vpop.f32.mrf.mxu0
  %450 = vmatprep.mubr.bf16.mxu0 0
  %451 = vmatmul.mubr.bf16.gmra.mxu0 %v265
  %v452 = vpop.f32.mrf.mxu0
  %v453 = vadd.f32 0.0, %v452
  %v454 = vpop.f32.mrf.mxu0
  %v455 = vpop.f32.mrf.mxu0
  %v456 = vadd.f32 0.0, %v455
  %v457 = vpop.f32.mrf.mxu0
  %458 = vmatprep.mubr.bf16.mxu0 0
  %459 = vmatmul.mubr.bf16.gmra.mxu0 %v268
  %v460 = vpop.f32.mrf.mxu0
  %v461 = vadd.f32 0.0, %v460
  %v462 = vpop.f32.mrf.mxu0
  %v463 = vpop.f32.mrf.mxu0
  %v464 = vadd.f32 0.0, %v463
  %v465 = vpop.f32.mrf.mxu0
  %466 = vmatprep.mubr.bf16.mxu0 0
  %467 = vmatmul.mubr.bf16.gmra.mxu0 %v271
  %v468 = vpop.f32.mrf.mxu0
  %v469 = vadd.f32 0.0, %v468
  %v470 = vpop.f32.mrf.mxu0
  %v471 = vpop.f32.mrf.mxu0
  %v472 = vadd.f32 0.0, %v471
  %v473 = vpop.f32.mrf.mxu0
  %474 = vmatprep.mubr.bf16.mxu0 0
  %475 = vmatmul.mubr.bf16.gmra.mxu0 %v274
  %v476 = vpop.f32.mrf.mxu0
  %v477 = vadd.f32 0.0, %v476
  %v478 = vpop.f32.mrf.mxu0
  %v479 = vpop.f32.mrf.mxu0
  %v480 = vadd.f32 0.0, %v479
  %v481 = vpop.f32.mrf.mxu0
  %482 = vmatprep.mubr.bf16.mxu0 0
  %483 = vmatmul.mubr.bf16.gmra.mxu0 %v277
  %v484 = vpop.f32.mrf.mxu0
  %v485 = vadd.f32 0.0, %v484
  %v486 = vpop.f32.mrf.mxu0
  %v487 = vpop.f32.mrf.mxu0
  %v488 = vadd.f32 0.0, %v487
  %v489 = vpop.f32.mrf.mxu0
  %490 = vmatprep.mubr.bf16.mxu0 0
  %491 = vmatmul.mubr.bf16.gmra.mxu0 %v280
  %v492 = vpop.f32.mrf.mxu0
  %v493 = vadd.f32 0.0, %v492
  %v494 = vpop.f32.mrf.mxu0
  %v495 = vpop.f32.mrf.mxu0
  %v496 = vadd.f32 0.0, %v495
  %v497 = vpop.f32.mrf.mxu0
  %498 = vmatprep.mubr.bf16.mxu0 0
  %499 = vmatmul.mubr.bf16.gmra.mxu0 %v283
  %v500 = vpop.f32.mrf.mxu0
  %v501 = vadd.f32 0.0, %v500
  %v502 = vpop.f32.mrf.mxu0
  %v503 = vpop.f32.mrf.mxu0
  %v504 = vadd.f32 0.0, %v503
  %v505 = vpop.f32.mrf.mxu0
  %506 = vmatprep.mubr.bf16.mxu0 0
  %507 = vmatmul.mubr.bf16.gmra.mxu0 %v286
  %v508 = vpop.f32.mrf.mxu0
  %v509 = vadd.f32 0.0, %v508
  %v510 = vpop.f32.mrf.mxu0
  %v511 = vpop.f32.mrf.mxu0
  %v512 = vadd.f32 0.0, %v511
  %v513 = vpop.f32.mrf.mxu0
  %514 = vmatprep.mubr.bf16.mxu0 0
  %515 = vmatmul.mubr.bf16.gmra.mxu0 %v289
  %v516 = vpop.f32.mrf.mxu0
  %v517 = vadd.f32 0.0, %v516
  %v518 = vpop.f32.mrf.mxu0
  %v519 = vpop.f32.mrf.mxu0
  %v520 = vadd.f32 0.0, %v519
  %v521 = vpop.f32.mrf.mxu0
  %522 = vmatprep.mubr.bf16.mxu0 0
  %523 = vmatmul.mubr.bf16.gmra.mxu0 %v292
  %v524 = vpop.f32.mrf.mxu0
  %v525 = vadd.f32 0.0, %v524
  %v526 = vpop.f32.mrf.mxu0
  %v527 = vpop.f32.mrf.mxu0
  %v528 = vadd.f32 0.0, %v527
  %v529 = vpop.f32.mrf.mxu0
  %530 = vmatprep.mubr.bf16.mxu0 0
  %531 = vmatmul.mubr.bf16.gmra.mxu0 %v295
  %v532 = vpop.f32.mrf.mxu0
  %v533 = vadd.f32 0.0, %v532
  %v534 = vpop.f32.mrf.mxu0
  %v535 = vpop.f32.mrf.mxu0
  %v536 = vadd.f32 0.0, %v535
  %v537 = vpop.f32.mrf.mxu0
  %538 = vmatprep.mubr.bf16.mxu0 0
  %539 = vmatmul.mubr.bf16.gmra.mxu0 %v298
  %v540 = vpop.f32.mrf.mxu0
  %v541 = vadd.f32 0.0, %v540
  %v542 = vpop.f32.mrf.mxu0
  %v543 = vpop.f32.mrf.mxu0
  %v544 = vadd.f32 0.0, %v543
  %v545 = vpop.f32.mrf.mxu0
  %546 = vmatprep.mubr.bf16.mxu0 0
  %547 = vmatmul.mubr.bf16.gmra.mxu0 %v301
  %v548 = vpop.f32.mrf.mxu0
  %v549 = vadd.f32 0.0, %v548
  %v550 = vpop.f32.mrf.mxu0
  %v551 = vpop.f32.mrf.mxu0
  %v552 = vadd.f32 0.0, %v551
  %v553 = vpop.f32.mrf.mxu0
  %554 = vmatprep.mubr.bf16.mxu0 0
  %555 = vmatmul.mubr.bf16.gmra.mxu0 %v304
  %v556 = vpop.f32.mrf.mxu0
  %v557 = vadd.f32 0.0, %v556
  %v558 = vpop.f32.mrf.mxu0
  %v559 = vpop.f32.mrf.mxu0
  %v560 = vadd.f32 0.0, %v559
  %v561 = vpop.f32.mrf.mxu0
  %562 = vmatprep.mubr.bf16.mxu0 0
  %563 = vmatmul.mubr.bf16.gmra.mxu0 %v307
  %v564 = vpop.f32.mrf.mxu0
  %v565 = vadd.f32 0.0, %v564
  %v566 = vpop.f32.mrf.mxu0
  %v567 = vpop.f32.mrf.mxu0
  %v568 = vadd.f32 0.0, %v567
  %v569 = vpop.f32.mrf.mxu0
  %570 = vmatprep.mubr.bf16.mxu0 0
  %571 = vmatmul.mubr.bf16.gmra.mxu0 %v310
  %v572 = vpop.f32.mrf.mxu0
  %v573 = vadd.f32 0.0, %v572
  %v574 = vpop.f32.mrf.mxu0
  %v575 = vpop.f32.mrf.mxu0
  %v576 = vadd.f32 0.0, %v575
  %v577 = vpop.f32.mrf.mxu0
  %578 = vmatprep.mubr.bf16.mxu0 0
  %579 = vmatmul.mubr.bf16.gmra.mxu0 %v313
  %v580 = vpop.f32.mrf.mxu0
  %v581 = vadd.f32 0.0, %v580
  %v582 = vpop.f32.mrf.mxu0
  %v583 = vpop.f32.mrf.mxu0
  %v584 = vpop.f32.mrf.mxu0
  %585 = vdwg.mxu0
  %vm586 = vcmask 261120
  %v587 = vsel %vm586, %v357, 0.0
  %v588 = vsel %vm586, %v360, 0.0
  %v589 = vadd.f32 %v587, %v588
  %v590 = vsel %vm586, %v365, 0.0
  %v591 = vadd.f32 %v589, %v590
  %v592 = vsel %vm586, %v368, 0.0
  %v593 = vadd.f32 %v591, %v592
  %v594 = vsel %vm586, %v373, 0.0
  %v595 = vadd.f32 %v593, %v594
  %v596 = vsel %vm586, %v376, 0.0
  %v597 = vadd.f32 %v595, %v596
  %v598 = vsel %vm586, %v381, 0.0
  %v599 = vadd.f32 %v597, %v598
  %v600 = vsel %vm586, %v384, 0.0
  %v601 = vadd.f32 %v599, %v600
  %v602 = vsel %vm586, %v389, 0.0
  %v603 = vadd.f32 %v601, %v602
  %v604 = vsel %vm586, %v392, 0.0
  %v605 = vadd.f32 %v603, %v604
  %v606 = vsel %vm586, %v397, 0.0
  %v607 = vadd.f32 %v605, %v606
  %v608 = vsel %vm586, %v400, 0.0
  %v609 = vadd.f32 %v607, %v608
  %v610 = vsel %vm586, %v405, 0.0
  %v611 = vadd.f32 %v609, %v610
  %v612 = vsel %vm586, %v408, 0.0
  %v613 = vadd.f32 %v611, %v612
  %v614 = vsel %vm586, %v413, 0.0
  %v615 = vadd.f32 %v613, %v614
  %v616 = vsel %vm586, %v416, 0.0
  %v617 = vadd.f32 %v615, %v616
  %v618 = vsel %vm586, %v421, 0.0
  %v619 = vadd.f32 %v617, %v618
  %v620 = vsel %vm586, %v424, 0.0
  %v621 = vadd.f32 %v619, %v620
  %v622 = vsel %vm586, %v429, 0.0
  %v623 = vadd.f32 %v621, %v622
  %v624 = vsel %vm586, %v432, 0.0
  %v625 = vadd.f32 %v623, %v624
  %v626 = vsel %vm586, %v437, 0.0
  %v627 = vadd.f32 %v625, %v626
  %v628 = vsel %vm586, %v440, 0.0
  %v629 = vadd.f32 %v627, %v628
  %v630 = vsel %vm586, %v445, 0.0
  %v631 = vadd.f32 %v629, %v630
  %v632 = vsel %vm586, %v448, 0.0
  %v633 = vadd.f32 %v631, %v632
  %v634 = vsel %vm586, %v453, 0.0
  %v635 = vadd.f32 %v633, %v634
  %v636 = vsel %vm586, %v456, 0.0
  %v637 = vadd.f32 %v635, %v636
  %v638 = vsel %vm586, %v461, 0.0
  %v639 = vadd.f32 %v637, %v638
  %v640 = vsel %vm586, %v464, 0.0
  %v641 = vadd.f32 %v639, %v640
  %v642 = vsel %vm586, %v469, 0.0
  %v643 = vadd.f32 %v641, %v642
  %v644 = vsel %vm586, %v472, 0.0
  %v645 = vadd.f32 %v643, %v644
  %v646 = vsel %vm586, %v477, 0.0
  %v647 = vadd.f32 %v645, %v646
  %v648 = vsel %vm586, %v480, 0.0
  %v649 = vadd.f32 %v647, %v648
  %v650 = vsel %vm586, %v485, 0.0
  %v651 = vadd.f32 %v649, %v650
  %v652 = vsel %vm586, %v488, 0.0
  %v653 = vadd.f32 %v651, %v652
  %v654 = vsel %vm586, %v493, 0.0
  %v655 = vadd.f32 %v653, %v654
  %v656 = vsel %vm586, %v496, 0.0
  %v657 = vadd.f32 %v655, %v656
  %v658 = vsel %vm586, %v501, 0.0
  %v659 = vadd.f32 %v657, %v658
  %v660 = vsel %vm586, %v504, 0.0
  %v661 = vadd.f32 %v659, %v660
  %v662 = vsel %vm586, %v509, 0.0
  %v663 = vadd.f32 %v661, %v662
  %v664 = vsel %vm586, %v512, 0.0
  %v665 = vadd.f32 %v663, %v664
  %v666 = vsel %vm586, %v517, 0.0
  %v667 = vadd.f32 %v665, %v666
  %v668 = vsel %vm586, %v520, 0.0
  %v669 = vadd.f32 %v667, %v668
  %v670 = vsel %vm586, %v525, 0.0
  %v671 = vadd.f32 %v669, %v670
  %v672 = vsel %vm586, %v528, 0.0
  %v673 = vadd.f32 %v671, %v672
  %v674 = vsel %vm586, %v533, 0.0
  %v675 = vadd.f32 %v673, %v674
  %v676 = vsel %vm586, %v536, 0.0
  %v677 = vadd.f32 %v675, %v676
  %v678 = vsel %vm586, %v541, 0.0
  %v679 = vadd.f32 %v677, %v678
  %v680 = vsel %vm586, %v544, 0.0
  %v681 = vadd.f32 %v679, %v680
  %v682 = vsel %vm586, %v549, 0.0
  %v683 = vadd.f32 %v681, %v682
  %v684 = vsel %vm586, %v552, 0.0
  %v685 = vadd.f32 %v683, %v684
  %v686 = vsel %vm586, %v557, 0.0
  %v687 = vadd.f32 %v685, %v686
  %v688 = vsel %vm586, %v560, 0.0
  %v689 = vadd.f32 %v687, %v688
  %v690 = vsel %vm586, %v565, 0.0
  %v691 = vadd.f32 %v689, %v690
  %v692 = vsel %vm586, %v568, 0.0
  %v693 = vadd.f32 %v691, %v692
  %v694 = vsel %vm586, %v573, 0.0
  %v695 = vadd.f32 %v693, %v694
  %v696 = vsel %vm586, %v576, 0.0
  %v697 = vadd.f32 %v695, %v696
  %vm698 = vcmask 254976
  %v699 = vsel %vm698, %v581, 0.0
  %v700 = vadd.f32 %v697, %v699
  %v701 = vrot.slane %v700, 4
  %v702 = vadd.f32 %v700, %v701
  %v703 = vrot.slane %v702, 2
  %v704 = vadd.f32 %v702, %v703
  %v705 = vrot.slane %v704, 1
  %v706 = vadd.f32 %v704, %v705
  %v707 = vrcp.pop 450.0
  %v708 = vmul.f32 %v706, %v707
  %v709 = vmul.f32 %v357, %v357
  %v710 = vmul.f32 %v360, %v360
  %v711 = vmul.f32 %v365, %v365
  %v712 = vmul.f32 %v368, %v368
  %v713 = vmul.f32 %v373, %v373
  %v714 = vmul.f32 %v376, %v376
  %v715 = vmul.f32 %v381, %v381
  %v716 = vmul.f32 %v384, %v384
  %v717 = vmul.f32 %v389, %v389
  %v718 = vmul.f32 %v392, %v392
  %v719 = vmul.f32 %v397, %v397
  %v720 = vmul.f32 %v400, %v400
  %v721 = vmul.f32 %v405, %v405
  %v722 = vmul.f32 %v408, %v408
  %v723 = vmul.f32 %v413, %v413
  %v724 = vmul.f32 %v416, %v416
  %v725 = vmul.f32 %v421, %v421
  %v726 = vmul.f32 %v424, %v424
  %v727 = vmul.f32 %v429, %v429
  %v728 = vmul.f32 %v432, %v432
  %v729 = vmul.f32 %v437, %v437
  %v730 = vmul.f32 %v440, %v440
  %v731 = vmul.f32 %v445, %v445
  %v732 = vmul.f32 %v448, %v448
  %v733 = vmul.f32 %v453, %v453
  %v734 = vmul.f32 %v456, %v456
  %v735 = vmul.f32 %v461, %v461
  %v736 = vmul.f32 %v464, %v464
  %v737 = vmul.f32 %v469, %v469
  %v738 = vmul.f32 %v472, %v472
  %v739 = vmul.f32 %v477, %v477
  %v740 = vmul.f32 %v480, %v480
  %v741 = vmul.f32 %v485, %v485
  %v742 = vmul.f32 %v488, %v488
  %v743 = vmul.f32 %v493, %v493
  %v744 = vmul.f32 %v496, %v496
  %v745 = vmul.f32 %v501, %v501
  %v746 = vmul.f32 %v504, %v504
  %v747 = vmul.f32 %v509, %v509
  %v748 = vmul.f32 %v512, %v512
  %v749 = vmul.f32 %v517, %v517
  %v750 = vmul.f32 %v520, %v520
  %v751 = vmul.f32 %v525, %v525
  %v752 = vmul.f32 %v528, %v528
  %v753 = vmul.f32 %v533, %v533
  %v754 = vmul.f32 %v536, %v536
  %v755 = vmul.f32 %v541, %v541
  %v756 = vmul.f32 %v544, %v544
  %v757 = vmul.f32 %v549, %v549
  %v758 = vmul.f32 %v552, %v552
  %v759 = vmul.f32 %v557, %v557
  %v760 = vmul.f32 %v560, %v560
  %v761 = vmul.f32 %v565, %v565
  %v762 = vmul.f32 %v568, %v568
  %v763 = vmul.f32 %v573, %v573
  %v764 = vmul.f32 %v576, %v576
  %v765 = vmul.f32 %v581, %v581
  %v766 = vsel %vm586, %v709, 0.0
  %v767 = vsel %vm586, %v710, 0.0
  %v768 = vadd.f32 %v766, %v767
  %v769 = vsel %vm586, %v711, 0.0
  %v770 = vadd.f32 %v768, %v769
  %v771 = vsel %vm586, %v712, 0.0
  %v772 = vadd.f32 %v770, %v771
  %v773 = vsel %vm586, %v713, 0.0
  %v774 = vadd.f32 %v772, %v773
  %v775 = vsel %vm586, %v714, 0.0
  %v776 = vadd.f32 %v774, %v775
  %v777 = vsel %vm586, %v715, 0.0
  %v778 = vadd.f32 %v776, %v777
  %v779 = vsel %vm586, %v716, 0.0
  %v780 = vadd.f32 %v778, %v779
  %v781 = vsel %vm586, %v717, 0.0
  %v782 = vadd.f32 %v780, %v781
  %v783 = vsel %vm586, %v718, 0.0
  %v784 = vadd.f32 %v782, %v783
  %v785 = vsel %vm586, %v719, 0.0
  %v786 = vadd.f32 %v784, %v785
  %v787 = vsel %vm586, %v720, 0.0
  %v788 = vadd.f32 %v786, %v787
  %v789 = vsel %vm586, %v721, 0.0
  %v790 = vadd.f32 %v788, %v789
  %v791 = vsel %vm586, %v722, 0.0
  %v792 = vadd.f32 %v790, %v791
  %v793 = vsel %vm586, %v723, 0.0
  %v794 = vadd.f32 %v792, %v793
  %v795 = vsel %vm586, %v724, 0.0
  %v796 = vadd.f32 %v794, %v795
  %v797 = vsel %vm586, %v725, 0.0
  %v798 = vadd.f32 %v796, %v797
  %v799 = vsel %vm586, %v726, 0.0
  %v800 = vadd.f32 %v798, %v799
  %v801 = vsel %vm586, %v727, 0.0
  %v802 = vadd.f32 %v800, %v801
  %v803 = vsel %vm586, %v728, 0.0
  %v804 = vadd.f32 %v802, %v803
  %v805 = vsel %vm586, %v729, 0.0
  %v806 = vadd.f32 %v804, %v805
  %v807 = vsel %vm586, %v730, 0.0
  %v808 = vadd.f32 %v806, %v807
  %v809 = vsel %vm586, %v731, 0.0
  %v810 = vadd.f32 %v808, %v809
  %v811 = vsel %vm586, %v732, 0.0
  %v812 = vadd.f32 %v810, %v811
  %v813 = vsel %vm586, %v733, 0.0
  %v814 = vadd.f32 %v812, %v813
  %v815 = vsel %vm586, %v734, 0.0
  %v816 = vadd.f32 %v814, %v815
  %v817 = vsel %vm586, %v735, 0.0
  %v818 = vadd.f32 %v816, %v817
  %v819 = vsel %vm586, %v736, 0.0
  %v820 = vadd.f32 %v818, %v819
  %v821 = vsel %vm586, %v737, 0.0
  %v822 = vadd.f32 %v820, %v821
  %v823 = vsel %vm586, %v738, 0.0
  %v824 = vadd.f32 %v822, %v823
  %v825 = vsel %vm586, %v739, 0.0
  %v826 = vadd.f32 %v824, %v825
  %v827 = vsel %vm586, %v740, 0.0
  %v828 = vadd.f32 %v826, %v827
  %v829 = vsel %vm586, %v741, 0.0
  %v830 = vadd.f32 %v828, %v829
  %v831 = vsel %vm586, %v742, 0.0
  %v832 = vadd.f32 %v830, %v831
  %v833 = vsel %vm586, %v743, 0.0
  %v834 = vadd.f32 %v832, %v833
  %v835 = vsel %vm586, %v744, 0.0
  %v836 = vadd.f32 %v834, %v835
  %v837 = vsel %vm586, %v745, 0.0
  %v838 = vadd.f32 %v836, %v837
  %v839 = vsel %vm586, %v746, 0.0
  %v840 = vadd.f32 %v838, %v839
  %v841 = vsel %vm586, %v747, 0.0
  %v842 = vadd.f32 %v840, %v841
  %v843 = vsel %vm586, %v748, 0.0
  %v844 = vadd.f32 %v842, %v843
  %v845 = vsel %vm586, %v749, 0.0
  %v846 = vadd.f32 %v844, %v845
  %v847 = vsel %vm586, %v750, 0.0
  %v848 = vadd.f32 %v846, %v847
  %v849 = vsel %vm586, %v751, 0.0
  %v850 = vadd.f32 %v848, %v849
  %v851 = vsel %vm586, %v752, 0.0
  %v852 = vadd.f32 %v850, %v851
  %v853 = vsel %vm586, %v753, 0.0
  %v854 = vadd.f32 %v852, %v853
  %v855 = vsel %vm586, %v754, 0.0
  %v856 = vadd.f32 %v854, %v855
  %v857 = vsel %vm586, %v755, 0.0
  %v858 = vadd.f32 %v856, %v857
  %v859 = vsel %vm586, %v756, 0.0
  %v860 = vadd.f32 %v858, %v859
  %v861 = vsel %vm586, %v757, 0.0
  %v862 = vadd.f32 %v860, %v861
  %v863 = vsel %vm586, %v758, 0.0
  %v864 = vadd.f32 %v862, %v863
  %v865 = vsel %vm586, %v759, 0.0
  %v866 = vadd.f32 %v864, %v865
  %v867 = vsel %vm586, %v760, 0.0
  %v868 = vadd.f32 %v866, %v867
  %v869 = vsel %vm586, %v761, 0.0
  %v870 = vadd.f32 %v868, %v869
  %v871 = vsel %vm586, %v762, 0.0
  %v872 = vadd.f32 %v870, %v871
  %v873 = vsel %vm586, %v763, 0.0
  %v874 = vadd.f32 %v872, %v873
  %v875 = vsel %vm586, %v764, 0.0
  %v876 = vadd.f32 %v874, %v875
  %v877 = vsel %vm698, %v765, 0.0
  %v878 = vadd.f32 %v876, %v877
  %v879 = vrot.slane %v878, 4
  %v880 = vadd.f32 %v878, %v879
  %v881 = vrot.slane %v880, 2
  %v882 = vadd.f32 %v880, %v881
  %v883 = vrot.slane %v882, 1
  %v884 = vadd.f32 %v882, %v883
  %v885 = vmul.f32 %v884, %v707
  %v886 = vmul.f32 %v708, %v708
  %v887 = vsub.f32 %v885, %v886
  %v888 = vmax.f32 %v887, 0.0
  %v889 = vsub.f32 %v357, %v708
  %v890 = vsub.f32 %v360, %v708
  %v891 = vsub.f32 %v365, %v708
  %v892 = vsub.f32 %v368, %v708
  %v893 = vsub.f32 %v373, %v708
  %v894 = vsub.f32 %v376, %v708
  %v895 = vsub.f32 %v381, %v708
  %v896 = vsub.f32 %v384, %v708
  %v897 = vsub.f32 %v389, %v708
  %v898 = vsub.f32 %v392, %v708
  %v899 = vsub.f32 %v397, %v708
  %v900 = vsub.f32 %v400, %v708
  %v901 = vsub.f32 %v405, %v708
  %v902 = vsub.f32 %v408, %v708
  %v903 = vsub.f32 %v413, %v708
  %v904 = vsub.f32 %v416, %v708
  %v905 = vsub.f32 %v421, %v708
  %v906 = vsub.f32 %v424, %v708
  %v907 = vsub.f32 %v429, %v708
  %v908 = vsub.f32 %v432, %v708
  %v909 = vsub.f32 %v437, %v708
  %v910 = vsub.f32 %v440, %v708
  %v911 = vsub.f32 %v445, %v708
  %v912 = vsub.f32 %v448, %v708
  %v913 = vsub.f32 %v453, %v708
  %v914 = vsub.f32 %v456, %v708
  %v915 = vsub.f32 %v461, %v708
  %v916 = vsub.f32 %v464, %v708
  %v917 = vsub.f32 %v469, %v708
  %v918 = vsub.f32 %v472, %v708
  %v919 = vsub.f32 %v477, %v708
  %v920 = vsub.f32 %v480, %v708
  %v921 = vsub.f32 %v485, %v708
  %v922 = vsub.f32 %v488, %v708
  %v923 = vsub.f32 %v493, %v708
  %v924 = vsub.f32 %v496, %v708
  %v925 = vsub.f32 %v501, %v708
  %v926 = vsub.f32 %v504, %v708
  %v927 = vsub.f32 %v509, %v708
  %v928 = vsub.f32 %v512, %v708
  %v929 = vsub.f32 %v517, %v708
  %v930 = vsub.f32 %v520, %v708
  %v931 = vsub.f32 %v525, %v708
  %v932 = vsub.f32 %v528, %v708
  %v933 = vsub.f32 %v533, %v708
  %v934 = vsub.f32 %v536, %v708
  %v935 = vsub.f32 %v541, %v708
  %v936 = vsub.f32 %v544, %v708
  %v937 = vsub.f32 %v549, %v708
  %v938 = vsub.f32 %v552, %v708
  %v939 = vsub.f32 %v557, %v708
  %v940 = vsub.f32 %v560, %v708
  %v941 = vsub.f32 %v565, %v708
  %v942 = vsub.f32 %v568, %v708
  %v943 = vsub.f32 %v573, %v708
  %v944 = vsub.f32 %v576, %v708
  %v945 = vsub.f32 %v581, %v708
  %v946 = vadd.f32 %v888, 1e-05
  %v947 = vrsqrt.pop %v946
  %v948 = vmul.f32 %v889, %v947
  %v949 = vmul.f32 %v890, %v947
  %v950 = vmul.f32 %v891, %v947
  %v951 = vmul.f32 %v892, %v947
  %v952 = vmul.f32 %v893, %v947
  %v953 = vmul.f32 %v894, %v947
  %v954 = vmul.f32 %v895, %v947
  %v955 = vmul.f32 %v896, %v947
  %v956 = vmul.f32 %v897, %v947
  %v957 = vmul.f32 %v898, %v947
  %v958 = vmul.f32 %v899, %v947
  %v959 = vmul.f32 %v900, %v947
  %v960 = vmul.f32 %v901, %v947
  %v961 = vmul.f32 %v902, %v947
  %v962 = vmul.f32 %v903, %v947
  %v963 = vmul.f32 %v904, %v947
  %v964 = vmul.f32 %v905, %v947
  %v965 = vmul.f32 %v906, %v947
  %v966 = vmul.f32 %v907, %v947
  %v967 = vmul.f32 %v908, %v947
  %v968 = vmul.f32 %v909, %v947
  %v969 = vmul.f32 %v910, %v947
  %v970 = vmul.f32 %v911, %v947
  %v971 = vmul.f32 %v912, %v947
  %v972 = vmul.f32 %v913, %v947
  %v973 = vmul.f32 %v914, %v947
  %v974 = vmul.f32 %v915, %v947
  %v975 = vmul.f32 %v916, %v947
  %v976 = vmul.f32 %v917, %v947
  %v977 = vmul.f32 %v918, %v947
  %v978 = vmul.f32 %v919, %v947
  %v979 = vmul.f32 %v920, %v947
  %v980 = vmul.f32 %v921, %v947
  %v981 = vmul.f32 %v922, %v947
  %v982 = vmul.f32 %v923, %v947
  %v983 = vmul.f32 %v924, %v947
  %v984 = vmul.f32 %v925, %v947
  %v985 = vmul.f32 %v926, %v947
  %v986 = vmul.f32 %v927, %v947
  %v987 = vmul.f32 %v928, %v947
  %v988 = vmul.f32 %v929, %v947
  %v989 = vmul.f32 %v930, %v947
  %v990 = vmul.f32 %v931, %v947
  %v991 = vmul.f32 %v932, %v947
  %v992 = vmul.f32 %v933, %v947
  %v993 = vmul.f32 %v934, %v947
  %v994 = vmul.f32 %v935, %v947
  %v995 = vmul.f32 %v936, %v947
  %v996 = vmul.f32 %v937, %v947
  %v997 = vmul.f32 %v938, %v947
  %v998 = vmul.f32 %v939, %v947
  %v999 = vmul.f32 %v940, %v947
  %v1000 = vmul.f32 %v941, %v947
  %v1001 = vmul.f32 %v942, %v947
  %v1002 = vmul.f32 %v943, %v947
  %v1003 = vmul.f32 %v944, %v947
  %v1004 = vmul.f32 %v945, %v947
  %v1005 = vmax.f32 %v948, 0.0
  %v1006 = vmax.f32 %v949, 0.0
  %v1007 = vmax.f32 %v950, 0.0
  %v1008 = vmax.f32 %v951, 0.0
  %v1009 = vmax.f32 %v952, 0.0
  %v1010 = vmax.f32 %v953, 0.0
  %v1011 = vmax.f32 %v954, 0.0
  %v1012 = vmax.f32 %v955, 0.0
  %v1013 = vmax.f32 %v956, 0.0
  %v1014 = vmax.f32 %v957, 0.0
  %v1015 = vmax.f32 %v958, 0.0
  %v1016 = vmax.f32 %v959, 0.0
  %v1017 = vmax.f32 %v960, 0.0
  %v1018 = vmax.f32 %v961, 0.0
  %v1019 = vmax.f32 %v962, 0.0
  %v1020 = vmax.f32 %v963, 0.0
  %v1021 = vmax.f32 %v964, 0.0
  %v1022 = vmax.f32 %v965, 0.0
  %v1023 = vmax.f32 %v966, 0.0
  %v1024 = vmax.f32 %v967, 0.0
  %v1025 = vmax.f32 %v968, 0.0
  %v1026 = vmax.f32 %v969, 0.0
  %v1027 = vmax.f32 %v970, 0.0
  %v1028 = vmax.f32 %v971, 0.0
  %v1029 = vmax.f32 %v972, 0.0
  %v1030 = vmax.f32 %v973, 0.0
  %v1031 = vmax.f32 %v974, 0.0
  %v1032 = vmax.f32 %v975, 0.0
  %v1033 = vmax.f32 %v976, 0.0
  %v1034 = vmax.f32 %v977, 0.0
  %v1035 = vmax.f32 %v978, 0.0
  %v1036 = vmax.f32 %v979, 0.0
  %v1037 = vmax.f32 %v980, 0.0
  %v1038 = vmax.f32 %v981, 0.0
  %v1039 = vmax.f32 %v982, 0.0
  %v1040 = vmax.f32 %v983, 0.0
  %v1041 = vmax.f32 %v984, 0.0
  %v1042 = vmax.f32 %v985, 0.0
  %v1043 = vmax.f32 %v986, 0.0
  %v1044 = vmax.f32 %v987, 0.0
  %v1045 = vmax.f32 %v988, 0.0
  %v1046 = vmax.f32 %v989, 0.0
  %v1047 = vmax.f32 %v990, 0.0
  %v1048 = vmax.f32 %v991, 0.0
  %v1049 = vmax.f32 %v992, 0.0
  %v1050 = vmax.f32 %v993, 0.0
  %v1051 = vmax.f32 %v994, 0.0
  %v1052 = vmax.f32 %v995, 0.0
  %v1053 = vmax.f32 %v996, 0.0
  %v1054 = vmax.f32 %v997, 0.0
  %v1055 = vmax.f32 %v998, 0.0
  %v1056 = vmax.f32 %v999, 0.0
  %v1057 = vmax.f32 %v1000, 0.0
  %v1058 = vmax.f32 %v1001, 0.0
  %v1059 = vmax.f32 %v1002, 0.0
  %v1060 = vmax.f32 %v1003, 0.0
  %v1061 = vmax.f32 %v1004, 0.0
  %1062 = vst.msk [vmem:[%s2] sm:$0xff] %vm586, %v1005
  %1063 = vst.msk [vmem:[%s2 + $0x8] sm:$0xff] %vm586, %v1006
  %1064 = vst.msk [vmem:[%s2 + $0x10] sm:$0xff] %vm586, %v1007
  %1065 = vst.msk [vmem:[%s2 + $0x18] sm:$0xff] %vm586, %v1008
  %1066 = vst.msk [vmem:[%s2 + $0x20] sm:$0xff] %vm586, %v1009
  %1067 = vst.msk [vmem:[%s2 + $0x28] sm:$0xff] %vm586, %v1010
  %1068 = vst.msk [vmem:[%s2 + $0x30] sm:$0xff] %vm586, %v1011
  %1069 = vst.msk [vmem:[%s2 + $0x38] sm:$0xff] %vm586, %v1012
  %1070 = vst.msk [vmem:[%s2 + $0x40] sm:$0xff] %vm586, %v1013
  %1071 = vst.msk [vmem:[%s2 + $0x48] sm:$0xff] %vm586, %v1014
  %1072 = vst.msk [vmem:[%s2 + $0x50] sm:$0xff] %vm586, %v1015
  %1073 = vst.msk [vmem:[%s2 + $0x58] sm:$0xff] %vm586, %v1016
  %1074 = vst.msk [vmem:[%s2 + $0x60] sm:$0xff] %vm586, %v1017
  %1075 = vst.msk [vmem:[%s2 + $0x68] sm:$0xff] %vm586, %v1018
  %1076 = vst.msk [vmem:[%s2 + $0x70] sm:$0xff] %vm586, %v1019
  %1077 = vst.msk [vmem:[%s2 + $0x78] sm:$0xff] %vm586, %v1020
  %1078 = vst.msk [vmem:[%s2 + $0x80] sm:$0xff] %vm586, %v1021
  %1079 = vst.msk [vmem:[%s2 + $0x88] sm:$0xff] %vm586, %v1022
  %1080 = vst.msk [vmem:[%s2 + $0x90] sm:$0xff] %vm586, %v1023
  %1081 = vst.msk [vmem:[%s2 + $0x98] sm:$0xff] %vm586, %v1024
  %1082 = vst.msk [vmem:[%s2 + $0xa0] sm:$0xff] %vm586, %v1025
  %1083 = vst.msk [vmem:[%s2 + $0xa8] sm:$0xff] %vm586, %v1026
  %1084 = vst.msk [vmem:[%s2 + $0xb0] sm:$0xff] %vm586, %v1027
  %1085 = vst.msk [vmem:[%s2 + $0xb8] sm:$0xff] %vm586, %v1028
  %1086 = vst.msk [vmem:[%s2 + $0xc0] sm:$0xff] %vm586, %v1029
  %1087 = vst.msk [vmem:[%s2 + $0xc8] sm:$0xff] %vm586, %v1030
  %1088 = vst.msk [vmem:[%s2 + $0xd0] sm:$0xff] %vm586, %v1031
  %1089 = vst.msk [vmem:[%s2 + $0xd8] sm:$0xff] %vm586, %v1032
  %1090 = vst.msk [vmem:[%s2 + $0xe0] sm:$0xff] %vm586, %v1033
  %1091 = vst.msk [vmem:[%s2 + $0xe8] sm:$0xff] %vm586, %v1034
  %1092 = vst.msk [vmem:[%s2 + $0xf0] sm:$0xff] %vm586, %v1035
  %1093 = vst.msk [vmem:[%s2 + $0xf8] sm:$0xff] %vm586, %v1036
  %1094 = vst.msk [vmem:[%s2 + $0x100] sm:$0xff] %vm586, %v1037
  %1095 = vst.msk [vmem:[%s2 + $0x108] sm:$0xff] %vm586, %v1038
  %1096 = vst.msk [vmem:[%s2 + $0x110] sm:$0xff] %vm586, %v1039
  %1097 = vst.msk [vmem:[%s2 + $0x118] sm:$0xff] %vm586, %v1040
  %1098 = vst.msk [vmem:[%s2 + $0x120] sm:$0xff] %vm586, %v1041
  %1099 = vst.msk [vmem:[%s2 + $0x128] sm:$0xff] %vm586, %v1042
  %1100 = vst.msk [vmem:[%s2 + $0x130] sm:$0xff] %vm586, %v1043
  %1101 = vst.msk [vmem:[%s2 + $0x138] sm:$0xff] %vm586, %v1044
  %1102 = vst.msk [vmem:[%s2 + $0x140] sm:$0xff] %vm586, %v1045
  %1103 = vst.msk [vmem:[%s2 + $0x148] sm:$0xff] %vm586, %v1046
  %1104 = vst.msk [vmem:[%s2 + $0x150] sm:$0xff] %vm586, %v1047
  %1105 = vst.msk [vmem:[%s2 + $0x158] sm:$0xff] %vm586, %v1048
  %1106 = vst.msk [vmem:[%s2 + $0x160] sm:$0xff] %vm586, %v1049
  %1107 = vst.msk [vmem:[%s2 + $0x168] sm:$0xff] %vm586, %v1050
  %1108 = vst.msk [vmem:[%s2 + $0x170] sm:$0xff] %vm586, %v1051
  %1109 = vst.msk [vmem:[%s2 + $0x178] sm:$0xff] %vm586, %v1052
  %1110 = vst.msk [vmem:[%s2 + $0x180] sm:$0xff] %vm586, %v1053
  %1111 = vst.msk [vmem:[%s2 + $0x188] sm:$0xff] %vm586, %v1054
  %1112 = vst.msk [vmem:[%s2 + $0x190] sm:$0xff] %vm586, %v1055
  %1113 = vst.msk [vmem:[%s2 + $0x198] sm:$0xff] %vm586, %v1056
  %1114 = vst.msk [vmem:[%s2 + $0x1a0] sm:$0xff] %vm586, %v1057
  %1115 = vst.msk [vmem:[%s2 + $0x1a8] sm:$0xff] %vm586, %v1058
  %1116 = vst.msk [vmem:[%s2 + $0x1b0] sm:$0xff] %vm586, %v1059
  %1117 = vst.msk [vmem:[%s2 + $0x1b8] sm:$0xff] %vm586, %v1060
  %1118 = vst.msk [vmem:[%s2 + $0x1c0] sm:$0x3] %vm698, %v1061
  // Predicated region
  $region10: #{dense_conv_bn_stage.1} parent=0 // pred_check
    _
  $region11: #{dense_conv_bn_stage.1} parent=0 // pred_check_branch
    %1120 = sbr.rel (0) target = $region13
  $region12: #{dense_conv_bn_stage.1} parent=0 // pred_region
    _
  $region13: #{dense_conv_bn_stage.1} parent=0 // pred_fallthru
    _
  // Predicated region
  $region14: #{dense_conv_bn_stage.1} parent=0 // pred_check
    _
  $region15: #{dense_conv_bn_stage.1} parent=0 // pred_check_branch
    %1122 = sbr.rel (0) target = $region17
  $region16: #{dense_conv_bn_stage.1} parent=0 // pred_region
    _
  $region17: #{dense_conv_bn_stage.1} parent=0 // pred_fallthru
    _

</llo_original>
